<compile_context>
chip_gen: v7x
topology: tpu7x:2x2x1
jax: 0.10.0
libtpu: 0.0.40
codegen_flags: <defaults>
</compile_context>

<pallas_src>
import functools

import jax
import jax.numpy as jnp
from jax.experimental import pallas as pl
from jax.experimental.pallas import tpu as pltpu


# ----------------------------------------------------------------------------
# Pallas kernel: T fused decode steps, all layers per step
# ----------------------------------------------------------------------------
def _zoneout_decoder_kernel(x_ref, state_in_ref, w_ref, b_ref,       # inputs
                            out_ref, state_out_ref,                  # outputs
                            state_vmem,                              # scratch
                            *, num_layers, hidden_size, in0_pad,
                            zoneout_cell, zoneout_hidden):
    """One grid step = one decode timestep.

    x_ref         : (B, in0_pad)    f32   (timestep t of the input sequence)
    state_in_ref  : (B, 2*L*H)      f32   initial [h0|c0|h1|c1|...] slab
    w_ref         : (rows, 4H)      f32/bf16  packed [Wih0^T;Whh0^T;Wih1^T;...]
    b_ref         : (L, 4H)         f32   pre-summed b_ih + b_hh per layer
    out_ref       : (B, H)          f32   top-layer h for this timestep
    state_out_ref : (B, 2*L*H)      f32   final state slab (aliased w/ input)
    state_vmem    : (B, 2*L*H)      f32   VMEM-resident carried state
    """
    H = hidden_size
    t = pl.program_id(0)

    @pl.when(t == 0)
    def _():
        state_vmem[...] = state_in_ref[...]

    state = state_vmem[...]                       # (B, 2*L*H) f32, one load
    x = x_ref[...]                                # (B, in0_pad) f32
    b_all = b_ref[...].astype(jnp.float32)        # (L, 4H)

    row = 0
    new_parts = []
    for layer in range(num_layers):
        in_l = in0_pad if layer == 0 else H
        w_ih_t = w_ref[row:row + in_l, :]         # (in_l, 4H) static 8-aligned
        row += in_l
        w_hh_t = w_ref[row:row + H, :]            # (H, 4H)
        row += H
        mxu_dtype = w_ih_t.dtype

        h = state[:, (2 * layer) * H:(2 * layer + 1) * H]          # (B, H)
        c = state[:, (2 * layer + 1) * H:(2 * layer + 2) * H]      # (B, H)

        # Two MXU matmuls summed (no lane-concat of [x, h]); f32 accumulate.
        gates = (jnp.dot(x.astype(mxu_dtype), w_ih_t,
                         preferred_element_type=jnp.float32)
                 + jnp.dot(h.astype(mxu_dtype), w_hh_t,
                           preferred_element_type=jnp.float32)
                 + b_all[layer:layer + 1, :])                       # (B, 4H)

        # Gate order [i, f, g, o]. Full-vreg activations + lane-mask select:
        # tanh only on lanes [2H, 3H), sigmoid elsewhere.
        lane = jax.lax.broadcasted_iota(jnp.int32, gates.shape, 1)
        use_tanh = (lane >= 2 * H) & (lane < 3 * H)
        act = jnp.where(use_tanh, jnp.tanh(gates), jax.nn.sigmoid(gates))
        i_g = act[:, 0 * H:1 * H]
        f_g = act[:, 1 * H:2 * H]
        g_g = act[:, 2 * H:3 * H]
        o_g = act[:, 3 * H:4 * H]

        c_new = f_g * c + i_g * g_g
        h_new = o_g * jnp.tanh(c_new)

        # Deterministic (eval-mode) zoneout blend: old + (1-z)*(new - old).
        c_b = c + (1.0 - zoneout_cell) * (c_new - c)
        h_b = h + (1.0 - zoneout_hidden) * (h_new - h)

        new_parts.append(h_b)
        new_parts.append(c_b)
        x = h_b                                    # feeds next layer in regs

    new_state = jnp.concatenate(new_parts, axis=-1)   # (B, 2*L*H) lane-dense
    state_vmem[...] = new_state                       # carried across steps
    out_ref[...] = x                                  # top-layer h, this step
    state_out_ref[...] = new_state                    # flushed once at end


# ----------------------------------------------------------------------------
# One-time parameter init / preparation (hoisted out of the hot path)
# ----------------------------------------------------------------------------
def init_zoneout_lstm_decoder_params(key, input_size, hidden_size, num_layers):
    """Raw nn.LSTMCell-shaped params: U(-1/sqrt(H), 1/sqrt(H))."""
    params = []
    k = 1.0 / jnp.sqrt(jnp.float32(hidden_size))
    for layer in range(num_layers):
        in_dim = input_size if layer == 0 else hidden_size
        key, k1, k2, k3, k4 = jax.random.split(key, 5)
        params.append(dict(
            w_ih=jax.random.uniform(k1, (4 * hidden_size, in_dim),
                                    jnp.float32, -k, k),
            w_hh=jax.random.uniform(k2, (4 * hidden_size, hidden_size),
                                    jnp.float32, -k, k),
            b_ih=jax.random.uniform(k3, (4 * hidden_size,), jnp.float32, -k, k),
            b_hh=jax.random.uniform(k4, (4 * hidden_size,), jnp.float32, -k, k),
        ))
    return params


def prepare_zoneout_lstm_decoder_params(raw_params, input_size, hidden_size,
                                        param_dtype=jnp.float32):
    """Pack all layers' weights into one (rows, 4H) slab and biases into (L,4H).

    Transposes, the layer-0 input padding (to a multiple of 8 sublanes), the
    bias pre-sum and the optional bf16 cast all happen ONCE here.
    """
    L = len(raw_params)
    H = hidden_size
    assert H % 8 == 0, "hidden_size must be a multiple of 8 for the packed layout"
    in0_pad = -(-input_size // 8) * 8
    blocks, biases = [], []
    for layer, p in enumerate(raw_params):
        w_ih_t = p["w_ih"].T.astype(jnp.float32)            # (in_l, 4H)
        if layer == 0 and in0_pad != input_size:
            w_ih_t = jnp.pad(w_ih_t, ((0, in0_pad - input_size), (0, 0)))
        blocks.append(w_ih_t)
        blocks.append(p["w_hh"].T.astype(jnp.float32))       # (H, 4H)
        biases.append((p["b_ih"] + p["b_hh"]).astype(jnp.float32))
    w_all = jnp.concatenate(blocks, axis=0).astype(param_dtype)
    b_all = jnp.stack(biases, axis=0)                        # (L, 4H) f32
    return dict(w_all=w_all, b_all=b_all, input_size=input_size,
                in0_pad=in0_pad, hidden_size=H, num_layers=L)


# ----------------------------------------------------------------------------
# Fused decode: one pallas_call, grid over T, weights/state VMEM-resident
# ----------------------------------------------------------------------------
@functools.partial(
    jax.jit,
    static_argnames=("input_size", "in0_pad", "num_layers", "hidden_size",
                     "zoneout_cell", "zoneout_hidden"))
def _zoneout_decode_fused(inputs, h_tuple, c_tuple, w_all, b_all, *,
                          input_size, in0_pad, num_layers, hidden_size,
                          zoneout_cell, zoneout_hidden):
    T, B, _ = inputs.shape
    H, L = hidden_size, num_layers

    x = inputs.astype(jnp.float32)
    if in0_pad != input_size:
        x = jnp.pad(x, ((0, 0), (0, 0), (0, in0_pad - input_size)))

    # Pack per-layer h/c into one lane-dense slab [h0|c0|h1|c1|...] (boundary only).
    parts = []
    for l in range(L):
        parts.append(h_tuple[l].astype(jnp.float32))
        parts.append(c_tuple[l].astype(jnp.float32))
    state = jnp.concatenate(parts, axis=-1)                  # (B, 2*L*H)

    kernel = functools.partial(
        _zoneout_decoder_kernel,
        num_layers=L, hidden_size=H, in0_pad=in0_pad,
        zoneout_cell=zoneout_cell, zoneout_hidden=zoneout_hidden)

    out_seq, state_out = pl.pallas_call(
        kernel,
        grid=(T,),
        in_specs=[
            # per-step input block
            pl.BlockSpec((None, B, in0_pad), lambda t: (t, 0, 0)),
            # constant-index blocks: DMA'd once, VMEM-resident for all T steps
            pl.BlockSpec((B, 2 * L * H), lambda t: (0, 0)),
            pl.BlockSpec(w_all.shape, lambda t: (0, 0)),
            pl.BlockSpec(b_all.shape, lambda t: (0, 0)),
        ],
        out_specs=(
            pl.BlockSpec((None, B, H), lambda t: (t, 0, 0)),
            pl.BlockSpec((B, 2 * L * H), lambda t: (0, 0)),
        ),
        out_shape=(
            jax.ShapeDtypeStruct((T, B, H), jnp.float32),
            jax.ShapeDtypeStruct((B, 2 * L * H), jnp.float32),
        ),
        scratch_shapes=[pltpu.VMEM((B, 2 * L * H), jnp.float32)],
        # In-place state update: input slab aliases the final-state output.
        input_output_aliases={1: 1},
        compiler_params=pltpu.CompilerParams(
            dimension_semantics=("arbitrary",)),   # T carries state: never parallel
    )(x, state, w_all, b_all)
    return out_seq, state_out


# ----------------------------------------------------------------------------
# Module-level wrapper mirroring ZoneoutLSTMDecoder.forward (eval-mode zoneout)
# ----------------------------------------------------------------------------
def zoneout_lstm_decoder_forward(prepared, inputs, hidden_state_list=None,
                                 cell_state_list=None, zoneout_cell=0.1,
                                 zoneout_hidden=0.1):
    """inputs: (T, B, input_size). T == 1 matches the PyTorch module exactly;
    T > 1 runs the fused multi-step decode (same per-step semantics).
    Returns (outputs (T, B, H), (h_list, c_list))."""
    T, B, in_size = inputs.shape
    H, L = prepared["hidden_size"], prepared["num_layers"]
    assert in_size == prepared["input_size"]

    if hidden_state_list is None:
        hidden_state_list = [jnp.zeros((B, H), jnp.float32) for _ in range(L)]
        cell_state_list = [jnp.zeros((B, H), jnp.float32) for _ in range(L)]

    out_seq, state_out = _zoneout_decode_fused(
        inputs, tuple(hidden_state_list), tuple(cell_state_list),
        prepared["w_all"], prepared["b_all"],
        input_size=prepared["input_size"], in0_pad=prepared["in0_pad"],
        num_layers=L, hidden_size=H,
        zoneout_cell=float(zoneout_cell), zoneout_hidden=float(zoneout_hidden))

    h_list = [state_out[:, (2 * l) * H:(2 * l + 1) * H] for l in range(L)]
    c_list = [state_out[:, (2 * l + 1) * H:(2 * l + 2) * H] for l in range(L)]
    return out_seq, (h_list, c_list)


# ----------------------------------------------------------------------------
# Pure-JAX reference (eval-mode zoneout semantics of the PyTorch module)
# ----------------------------------------------------------------------------
def _ref_decode(raw_params, inputs, hidden_state_list=None, cell_state_list=None,
                zoneout_cell=0.1, zoneout_hidden=0.1):
    T, B, _ = inputs.shape
    H = raw_params[0]["w_hh"].shape[1]
    L = len(raw_params)
    hp = jax.lax.Precision.HIGHEST
    h = [jnp.zeros((B, H), jnp.float32) if hidden_state_list is None
         else hidden_state_list[i] for i in range(L)]
    c = [jnp.zeros((B, H), jnp.float32) if cell_state_list is None
         else cell_state_list[i] for i in range(L)]
    outs = []
    for t in range(T):
        x = inputs[t]
        for i, p in enumerate(raw_params):
            gates = (jnp.dot(x, p["w_ih"].T, precision=hp) + p["b_ih"]
                     + jnp.dot(h[i], p["w_hh"].T, precision=hp) + p["b_hh"])
            i_g, f_g, g_g, o_g = jnp.split(gates, 4, axis=1)
            i_g = jax.nn.sigmoid(i_g)
            f_g = jax.nn.sigmoid(f_g)
            o_g = jax.nn.sigmoid(o_g)
            g_g = jnp.tanh(g_g)
            c_new = f_g * c[i] + i_g * g_g
            h_new = o_g * jnp.tanh(c_new)
            c[i] = (1 - zoneout_cell) * c_new + zoneout_cell * c[i]
            h[i] = (1 - zoneout_hidden) * h_new + zoneout_hidden * h[i]
            x = h[i]
        outs.append(x)
    return jnp.stack(outs, axis=0), (h, c)


if __name__ == "__main__":
    key = jax.random.PRNGKey(0)
    batch = 2
    input_size = 48
    hidden_size = 32
    num_layers = 2

    pkey, xkey, hkey, ckey, skey = jax.random.split(key, 5)
    raw_params = init_zoneout_lstm_decoder_params(pkey, input_size,
                                                  hidden_size, num_layers)

    # Non-zero recurrent state to exercise the h @ W_hh path as well.
    h_in = [0.5 * jax.random.normal(jax.random.fold_in(hkey, l),
                                    (batch, hidden_size), jnp.float32)
            for l in range(num_layers)]
    c_in = [0.5 * jax.random.normal(jax.random.fold_in(ckey, l),
                                    (batch, hidden_size), jnp.float32)
            for l in range(num_layers)]

    # ---------------- f32 weights (default) --------------------------------
    params_f32 = prepare_zoneout_lstm_decoder_params(
        raw_params, input_size, hidden_size, param_dtype=jnp.float32)

    # 1) Single step (module semantics, seq == 1), zero initial state.
    x1 = jax.random.normal(xkey, (1, batch, input_size), jnp.float32)
    out0, (h0, c0) = zoneout_lstm_decoder_forward(params_f32, x1)
    out0 = jax.block_until_ready(out0)
    ref0, (rh0, rc0) = _ref_decode(raw_params, x1)
    assert out0.shape == (1, batch, hidden_size)
    assert jnp.allclose(out0, ref0, atol=2e-5, rtol=1e-5)
    for l in range(num_layers):
        assert jnp.allclose(h0[l], rh0[l], atol=2e-5, rtol=1e-5)
        assert jnp.allclose(c0[l], rc0[l], atol=2e-5, rtol=1e-5)

    # 2) Single step with provided non-zero recurrent state.
    out1, (h1, c1) = zoneout_lstm_decoder_forward(params_f32, x1, h_in, c_in)
    out1 = jax.block_until_ready(out1)
    ref1, (rh1, rc1) = _ref_decode(raw_params, x1, h_in, c_in)
    assert jnp.allclose(out1, ref1, atol=2e-5, rtol=1e-5)
    for l in range(num_layers):
        assert jnp.allclose(h1[l], rh1[l], atol=2e-5, rtol=1e-5)
        assert jnp.allclose(c1[l], rc1[l], atol=2e-5, rtol=1e-5)

    # 3) Fused multi-step decode (T=8 fused into one pallas_call).
    T = 8
    xs = jax.random.normal(skey, (T, batch, input_size), jnp.float32)
    out_seq, (hT, cT) = zoneout_lstm_decoder_forward(params_f32, xs, h_in, c_in)
    out_seq = jax.block_until_ready(out_seq)
    ref_seq, (rhT, rcT) = _ref_decode(raw_params, xs, h_in, c_in)
    assert out_seq.shape == (T, batch, hidden_size)
    assert jnp.allclose(out_seq, ref_seq, atol=1e-4, rtol=1e-4)
    for l in range(num_layers):
        assert jnp.allclose(hT[l], rhT[l], atol=1e-4, rtol=1e-4)
        assert jnp.allclose(cT[l], rcT[l], atol=1e-4, rtol=1e-4)

    # ------------- bf16 MXU inputs, f32 state & accumulation ---------------
    params_bf16 = prepare_zoneout_lstm_decoder_params(
        raw_params, input_size, hidden_size, param_dtype=jnp.bfloat16)
    out_b, _ = zoneout_lstm_decoder_forward(params_bf16, xs, h_in, c_in)
    out_b = jax.block_until_ready(out_b)
    assert jnp.allclose(out_b, ref_seq, atol=1e-1, rtol=0.0)

    print("KERNEL_OK")
</pallas_src>

<mosaic_0001>
module attributes {stable_mosaic.version = 11 : i64} {
  func.func @_zoneout_decoder_kernel(%arg0: i32, %arg1: memref<1x2x48xf32, #tpu.memory_space<vmem>>, %arg2: memref<2x128xf32, #tpu.memory_space<vmem>>, %arg3: memref<144x128xf32, #tpu.memory_space<vmem>>, %arg4: memref<2x128xf32, #tpu.memory_space<vmem>>, %arg5: memref<1x2x32xf32, #tpu.memory_space<vmem>>, %arg6: memref<2x128xf32, #tpu.memory_space<vmem>>, %arg7: memref<2x128xf32, #tpu.memory_space<vmem>>) attributes {dimension_semantics = [#tpu.dimension_semantics<arbitrary>], iteration_bounds = array<i64: 1>, scalar_prefetch = 0 : i64, scratch_operands = 1 : i64, tpu.core_type = #tpu.core_type<tc>, window_params = [{transform_indices = @transform_0, window_bounds = array<i64: 1, 2, 48>}, {pipeline_mode = #tpu.pipeline_mode<synchronous>, transform_indices = @transform_1, window_bounds = array<i64: 2, 128>}, {pipeline_mode = #tpu.pipeline_mode<synchronous>, transform_indices = @transform_2, window_bounds = array<i64: 144, 128>}, {pipeline_mode = #tpu.pipeline_mode<synchronous>, transform_indices = @transform_3, window_bounds = array<i64: 2, 128>}, {transform_indices = @transform_4, window_bounds = array<i64: 1, 2, 32>}, {pipeline_mode = #tpu.pipeline_mode<synchronous>, transform_indices = @transform_5, window_bounds = array<i64: 2, 128>}]} {
    %c0_i32 = arith.constant 0 : i32
    %0 = arith.cmpi eq, %arg0, %c0_i32 : i32
    %1 = arith.extui %0 : i1 to i32
    %c0_i32_0 = arith.constant 0 : i32
    %2 = arith.cmpi ne, %1, %c0_i32_0 : i32
    scf.if %2 {
      %c0_30 = arith.constant 0 : index
      %c0_31 = arith.constant 0 : index
      %93 = vector.load %arg2[%c0_30, %c0_31] : memref<2x128xf32, #tpu.memory_space<vmem>>, vector<2x128xf32>
      %c0_32 = arith.constant 0 : index
      %c0_33 = arith.constant 0 : index
      %94 = vector.load %arg7[%c0_32, %c0_33] : memref<2x128xf32, #tpu.memory_space<vmem>>, vector<2x128xf32>
      tpu.vector_store %arg7[%c0_32, %c0_33], %93 {strides = array<i32>} : memref<2x128xf32, #tpu.memory_space<vmem>>, vector<2x128xf32>,
    } else {
    }
    %c0 = arith.constant 0 : index
    %c0_1 = arith.constant 0 : index
    %3 = vector.load %arg7[%c0, %c0_1] : memref<2x128xf32, #tpu.memory_space<vmem>>, vector<2x128xf32>
    %c0_2 = arith.constant 0 : index
    %c0_3 = arith.constant 0 : index
    %c0_4 = arith.constant 0 : index
    %4 = vector.load %arg1[%c0_2, %c0_3, %c0_4] : memref<1x2x48xf32, #tpu.memory_space<vmem>>, vector<1x2x48xf32>
    %5 = vector.shape_cast %4 : vector<1x2x48xf32> to vector<2x48xf32>
    %c0_5 = arith.constant 0 : index
    %c0_6 = arith.constant 0 : index
    %6 = vector.load %arg4[%c0_5, %c0_6] : memref<2x128xf32, #tpu.memory_space<vmem>>, vector<2x128xf32>
    %c0_7 = arith.constant 0 : index
    %c0_8 = arith.constant 0 : index
    %7 = vector.load %arg3[%c0_7, %c0_8] : memref<144x128xf32, #tpu.memory_space<vmem>>, vector<48x128xf32>
    %c48 = arith.constant 48 : index
    %c0_9 = arith.constant 0 : index
    %8 = vector.load %arg3[%c48, %c0_9] : memref<144x128xf32, #tpu.memory_space<vmem>>, vector<32x128xf32>
    %9 = vector.extract_strided_slice %3 {offsets = [0, 0], sizes = [2, 32], strides = [1, 1]} : vector<2x128xf32> to vector<2x32xf32>
    %10 = vector.extract_strided_slice %3 {offsets = [0, 32], sizes = [2, 32], strides = [1, 1]} : vector<2x128xf32> to vector<2x32xf32>
    %cst = arith.constant dense<0.000000e+00> : vector<2x128xf32>
    %11 = tpu.matmul %5, %7, %cst {dimension_numbers = #tpu.dot_dimension_numbers<[1], [0], [0], [1], [0, 0, 1, 1], [], []>} : vector<2x48xf32>, vector<48x128xf32>, vector<2x128xf32> -> vector<2x128xf32>
    %cst_10 = arith.constant dense<0.000000e+00> : vector<2x128xf32>
    %12 = tpu.matmul %9, %8, %cst_10 {dimension_numbers = #tpu.dot_dimension_numbers<[1], [0], [0], [1], [0, 0, 1, 1], [], []>} : vector<2x32xf32>, vector<32x128xf32>, vector<2x128xf32> -> vector<2x128xf32>
    %13 = arith.addf %11, %12 : vector<2x128xf32>
    %14 = vector.extract_strided_slice %6 {offsets = [0, 0], sizes = [1, 128], strides = [1, 1]} : vector<2x128xf32> to vector<1x128xf32>
    %15 = vector.broadcast %14 : vector<1x128xf32> to vector<2x128xf32>
    %16 = arith.addf %13, %15 : vector<2x128xf32>
    %17 = tpu.iota {dimensions = array<i32: 1>} : vector<2x128xi32>
    %c64_i32 = arith.constant 64 : i32
    %18 = vector.broadcast %c64_i32 : i32 to vector<2x128xi32>
    %19 = arith.cmpi sge, %17, %18 : vector<2x128xi32>
    %c96_i32 = arith.constant 96 : i32
    %20 = vector.broadcast %c96_i32 : i32 to vector<2x128xi32>
    %21 = arith.cmpi slt, %17, %20 : vector<2x128xi32>
    %22 = arith.andi %19, %21 : vector<2x128xi1>
    %23 = math.tanh %16 : vector<2x128xf32>
    %24 = arith.negf %16 : vector<2x128xf32>
    %25 = math.exp %24 : vector<2x128xf32>
    %cst_11 = arith.constant 1.000000e+00 : f32
    %26 = vector.broadcast %cst_11 : f32 to vector<2x128xf32>
    %27 = arith.addf %26, %25 : vector<2x128xf32>
    %28 = arith.divf %26, %27 : vector<2x128xf32>
    %29 = arith.select %22, %23, %28 : vector<2x128xi1>, vector<2x128xf32>
    %30 = vector.extract_strided_slice %29 {offsets = [0, 0], sizes = [2, 32], strides = [1, 1]} : vector<2x128xf32> to vector<2x32xf32>
    %31 = vector.extract_strided_slice %29 {offsets = [0, 32], sizes = [2, 32], strides = [1, 1]} : vector<2x128xf32> to vector<2x32xf32>
    %32 = vector.extract_strided_slice %29 {offsets = [0, 64], sizes = [2, 32], strides = [1, 1]} : vector<2x128xf32> to vector<2x32xf32>
    %33 = vector.extract_strided_slice %29 {offsets = [0, 96], sizes = [2, 32], strides = [1, 1]} : vector<2x128xf32> to vector<2x32xf32>
    %34 = arith.mulf %31, %10 : vector<2x32xf32>
    %35 = arith.mulf %30, %32 : vector<2x32xf32>
    %36 = arith.addf %34, %35 : vector<2x32xf32>
    %37 = math.tanh %36 : vector<2x32xf32>
    %38 = arith.mulf %33, %37 : vector<2x32xf32>
    %39 = arith.subf %36, %10 : vector<2x32xf32>
    %cst_12 = arith.constant 0.899999976 : f32
    %40 = vector.broadcast %cst_12 : f32 to vector<2x32xf32>
    %41 = arith.mulf %40, %39 : vector<2x32xf32>
    %42 = arith.addf %10, %41 : vector<2x32xf32>
    %43 = arith.subf %38, %9 : vector<2x32xf32>
    %cst_13 = arith.constant 0.899999976 : f32
    %44 = vector.broadcast %cst_13 : f32 to vector<2x32xf32>
    %45 = arith.mulf %44, %43 : vector<2x32xf32>
    %46 = arith.addf %9, %45 : vector<2x32xf32>
    %c80 = arith.constant 80 : index
    %c0_14 = arith.constant 0 : index
    %47 = vector.load %arg3[%c80, %c0_14] : memref<144x128xf32, #tpu.memory_space<vmem>>, vector<32x128xf32>
    %c112 = arith.constant 112 : index
    %c0_15 = arith.constant 0 : index
    %48 = vector.load %arg3[%c112, %c0_15] : memref<144x128xf32, #tpu.memory_space<vmem>>, vector<32x128xf32>
    %49 = vector.extract_strided_slice %3 {offsets = [0, 64], sizes = [2, 32], strides = [1, 1]} : vector<2x128xf32> to vector<2x32xf32>
    %50 = vector.extract_strided_slice %3 {offsets = [0, 96], sizes = [2, 32], strides = [1, 1]} : vector<2x128xf32> to vector<2x32xf32>
    %cst_16 = arith.constant dense<0.000000e+00> : vector<2x128xf32>
    %51 = tpu.matmul %46, %47, %cst_16 {dimension_numbers = #tpu.dot_dimension_numbers<[1], [0], [0], [1], [0, 0, 1, 1], [], []>} : vector<2x32xf32>, vector<32x128xf32>, vector<2x128xf32> -> vector<2x128xf32>
    %cst_17 = arith.constant dense<0.000000e+00> : vector<2x128xf32>
    %52 = tpu.matmul %49, %48, %cst_17 {dimension_numbers = #tpu.dot_dimension_numbers<[1], [0], [0], [1], [0, 0, 1, 1], [], []>} : vector<2x32xf32>, vector<32x128xf32>, vector<2x128xf32> -> vector<2x128xf32>
    %53 = arith.addf %51, %52 : vector<2x128xf32>
    %54 = vector.extract_strided_slice %6 {offsets = [1, 0], sizes = [1, 128], strides = [1, 1]} : vector<2x128xf32> to vector<1x128xf32>
    %55 = vector.broadcast %54 : vector<1x128xf32> to vector<2x128xf32>
    %56 = arith.addf %53, %55 : vector<2x128xf32>
    %57 = tpu.iota {dimensions = array<i32: 1>} : vector<2x128xi32>
    %c64_i32_18 = arith.constant 64 : i32
    %58 = vector.broadcast %c64_i32_18 : i32 to vector<2x128xi32>
    %59 = arith.cmpi sge, %57, %58 : vector<2x128xi32>
    %c96_i32_19 = arith.constant 96 : i32
    %60 = vector.broadcast %c96_i32_19 : i32 to vector<2x128xi32>
    %61 = arith.cmpi slt, %57, %60 : vector<2x128xi32>
    %62 = arith.andi %59, %61 : vector<2x128xi1>
    %63 = math.tanh %56 : vector<2x128xf32>
    %64 = arith.negf %56 : vector<2x128xf32>
    %65 = math.exp %64 : vector<2x128xf32>
    %cst_20 = arith.constant 1.000000e+00 : f32
    %66 = vector.broadcast %cst_20 : f32 to vector<2x128xf32>
    %67 = arith.addf %66, %65 : vector<2x128xf32>
    %68 = arith.divf %66, %67 : vector<2x128xf32>
    %69 = arith.select %62, %63, %68 : vector<2x128xi1>, vector<2x128xf32>
    %70 = vector.extract_strided_slice %69 {offsets = [0, 0], sizes = [2, 32], strides = [1, 1]} : vector<2x128xf32> to vector<2x32xf32>
    %71 = vector.extract_strided_slice %69 {offsets = [0, 32], sizes = [2, 32], strides = [1, 1]} : vector<2x128xf32> to vector<2x32xf32>
    %72 = vector.extract_strided_slice %69 {offsets = [0, 64], sizes = [2, 32], strides = [1, 1]} : vector<2x128xf32> to vector<2x32xf32>
    %73 = vector.extract_strided_slice %69 {offsets = [0, 96], sizes = [2, 32], strides = [1, 1]} : vector<2x128xf32> to vector<2x32xf32>
    %74 = arith.mulf %71, %50 : vector<2x32xf32>
    %75 = arith.mulf %70, %72 : vector<2x32xf32>
    %76 = arith.addf %74, %75 : vector<2x32xf32>
    %77 = math.tanh %76 : vector<2x32xf32>
    %78 = arith.mulf %73, %77 : vector<2x32xf32>
    %79 = arith.subf %76, %50 : vector<2x32xf32>
    %cst_21 = arith.constant 0.899999976 : f32
    %80 = vector.broadcast %cst_21 : f32 to vector<2x32xf32>
    %81 = arith.mulf %80, %79 : vector<2x32xf32>
    %82 = arith.addf %50, %81 : vector<2x32xf32>
    %83 = arith.subf %78, %49 : vector<2x32xf32>
    %cst_22 = arith.constant 0.899999976 : f32
    %84 = vector.broadcast %cst_22 : f32 to vector<2x32xf32>
    %85 = arith.mulf %84, %83 : vector<2x32xf32>
    %86 = arith.addf %49, %85 : vector<2x32xf32>
    %87 = tpu.concatenate %46, %42, %86, %82 in 1 : vector<2x32xf32>, vector<2x32xf32>, vector<2x32xf32>, vector<2x32xf32> -> vector<2x128xf32>
    %c0_23 = arith.constant 0 : index
    %c0_24 = arith.constant 0 : index
    %88 = vector.load %arg7[%c0_23, %c0_24] : memref<2x128xf32, #tpu.memory_space<vmem>>, vector<2x128xf32>
    tpu.vector_store %arg7[%c0_23, %c0_24], %87 {strides = array<i32>} : memref<2x128xf32, #tpu.memory_space<vmem>>, vector<2x128xf32>,
    %c0_25 = arith.constant 0 : index
    %c0_26 = arith.constant 0 : index
    %c0_27 = arith.constant 0 : index
    %89 = vector.load %arg5[%c0_25, %c0_26, %c0_27] : memref<1x2x32xf32, #tpu.memory_space<vmem>>, vector<1x2x32xf32>
    %90 = vector.shape_cast %89 : vector<1x2x32xf32> to vector<2x32xf32>
    %91 = vector.shape_cast %86 : vector<2x32xf32> to vector<1x2x32xf32>
    tpu.vector_store %arg5[%c0_25, %c0_26, %c0_27], %91 {strides = array<i32>} : memref<1x2x32xf32, #tpu.memory_space<vmem>>, vector<1x2x32xf32>,
    %c0_28 = arith.constant 0 : index
    %c0_29 = arith.constant 0 : index
    %92 = vector.load %arg6[%c0_28, %c0_29] : memref<2x128xf32, #tpu.memory_space<vmem>>, vector<2x128xf32>
    tpu.vector_store %arg6[%c0_28, %c0_29], %87 {strides = array<i32>} : memref<2x128xf32, #tpu.memory_space<vmem>>, vector<2x128xf32>,
    return
  }
  func.func @transform_0(%arg0: i32) -> (i32, i32, i32) {
    %c0_i32 = arith.constant 0 : i32
    %c0_i32_0 = arith.constant 0 : i32
    %c0_i32_1 = arith.constant 0 : i32
    return %arg0, %c0_i32, %c0_i32_0 : i32, i32, i32
  }
  func.func @transform_1(%arg0: i32) -> (i32, i32) {
    %c0_i32 = arith.constant 0 : i32
    %c0_i32_0 = arith.constant 0 : i32
    %c0_i32_1 = arith.constant 0 : i32
    return %c0_i32, %c0_i32_0 : i32, i32
  }
  func.func @transform_2(%arg0: i32) -> (i32, i32) {
    %c0_i32 = arith.constant 0 : i32
    %c0_i32_0 = arith.constant 0 : i32
    %c0_i32_1 = arith.constant 0 : i32
    return %c0_i32, %c0_i32_0 : i32, i32
  }
  func.func @transform_3(%arg0: i32) -> (i32, i32) {
    %c0_i32 = arith.constant 0 : i32
    %c0_i32_0 = arith.constant 0 : i32
    %c0_i32_1 = arith.constant 0 : i32
    return %c0_i32, %c0_i32_0 : i32, i32
  }
  func.func @transform_4(%arg0: i32) -> (i32, i32, i32) {
    %c0_i32 = arith.constant 0 : i32
    %c0_i32_0 = arith.constant 0 : i32
    %c0_i32_1 = arith.constant 0 : i32
    return %arg0, %c0_i32, %c0_i32_0 : i32, i32, i32
  }
  func.func @transform_5(%arg0: i32) -> (i32, i32) {
    %c0_i32 = arith.constant 0 : i32
    %c0_i32_0 = arith.constant 0 : i32
    %c0_i32_1 = arith.constant 0 : i32
    return %c0_i32, %c0_i32_0 : i32, i32
  }
}

</mosaic_0001>

<llo_original>
// kernel: _zoneout_decode_fused.1
$region0: #{_zoneout_decode_fused.1}
  #allocation0 [shape = 'u32[]', space=smem, size = 0x4, offset = 0x4, fixed_abs, tag = 'smem constant byte address 0x4 - core index']
  #allocation1 [shape = 'u32[144,128]{1,0:T(1,128)}', space=vmem, size = 0x12000, scoped, tag = 'internal scratch']
  #allocation2 [shape = 'f32[2,128]{1,0:T(2,128)}', space=vmem, size = 0x400, scoped, tag = 'scratch operand']
  %s0 = inlined_call_operand.vmem [shape: f32[1,2,48], index: 0, kind: input, shape index: {}]
  %s1 = inlined_call_operand.hbm [shape: f32[2,128], index: 1, kind: input, shape index: {}, may-alias: {1,5}]
  %s2 = inlined_call_operand.hbm [shape: f32[144,128], index: 2, kind: input, shape index: {}]
  %s3 = inlined_call_operand.vmem [shape: f32[2,128], index: 3, kind: input, shape index: {}]
  %s4 = inlined_call_operand.hbm [shape: f32[1,2,32], index: 4, kind: output, shape index: {0}]
  %s5 = inlined_call_operand.hbm [shape: f32[2,128], index: 5, kind: output, shape index: {1}, may-alias: {1,5}]
  %6 = xla_tuple %s4, %s5
  %s7 = sld [smem:[#allocation0]]
  $region46: #{_zoneout_decode_fused.1} parent=0
    _
  %s9 = ssub.s32 1, %s7
  %s10 = scalar_select 0, %s9, %s7
  $region1: #{_zoneout_decode_fused.1} parent=0
    #allocation3 [shape = 'u8[1024]{0}', space=vmem, size = 0x400, scoped, tag = 'input window, operand 1, single buffered']
    #allocation4 [shape = 's32[1]{0}', space=sflag, size = 0x4, scoped, tag = 'scoped memory for _zoneout_decode_fused.1']
    #allocation5 [shape = 's32[1]{0}', space=sflag, size = 0x4, scoped, tag = 'scoped memory for _zoneout_decode_fused.1']
    #allocation6 [shape = 'u8[73728]{0}', space=vmem, size = 0x12000, scoped, tag = 'input window, operand 2, single buffered']
    #allocation7 [shape = 's32[1]{0}', space=sflag, size = 0x4, scoped, tag = 'scoped memory for _zoneout_decode_fused.1']
    #allocation8 [shape = 'u8[1024]{0}', space=vmem, size = 0x400, scoped, tag = 'output window, operand 0, single buffered']
    #allocation9 [shape = 'u8[1024]{0}', space=vmem, size = 0x400, scoped, tag = 'output window, operand 1, single buffered']
    #allocation10 [shape = 's32[1]{0}', space=sflag, size = 0x4, scoped, tag = 'scoped memory for _zoneout_decode_fused.1']
    %11 = vsyncpa [#allocation4], 0
    %12 = vsyncpa [#allocation7], 0
    %13 = vsyncpa [#allocation5], 0
    %14 = vsyncpa [#allocation10], 0
    // Predicated region
    $region2: #{_zoneout_decode_fused.1} parent=1 // pred_check
      _
    $region3: #{_zoneout_decode_fused.1} parent=1 // pred_check_branch
      %16 = sbr.rel (0) target = $region5
    $region4: #{_zoneout_decode_fused.1} parent=1 // pred_region
      _
    $region5: #{_zoneout_decode_fused.1} parent=1 // pred_fallthru
      _
    // Predicated region
    $region6: #{_zoneout_decode_fused.1} parent=1 // pred_check
      _
    $region7: #{_zoneout_decode_fused.1} parent=1 // pred_check_branch
      %18 = sbr.rel (0) target = $region9
    $region8: #{_zoneout_decode_fused.1} parent=1 // pred_region
      %s20 = ssub.s32 32, 32
      %21 = vsyncadd [#allocation4], %s20
      %s23 = sshll.u32 [#allocation3], 4
      %s24 = int_to_ptr.vmem [resolvable:$true] %s23
      %26 = dma.hbm_to_vmem [thread:$0]  %s1, 32, %s24, [#allocation4]
    $region9: #{_zoneout_decode_fused.1} parent=1 // pred_fallthru
      _
    // Predicated region
    $region10: #{_zoneout_decode_fused.1} parent=1 // pred_check
      _
    $region11: #{_zoneout_decode_fused.1} parent=1 // pred_check_branch
      %28 = sbr.rel (0) target = $region13
    $region12: #{_zoneout_decode_fused.1} parent=1 // pred_region
      %s30 = ssub.s32 2304, 2304
      %31 = vsyncadd [#allocation7], %s30
      %s32 = sshll.u32 [#allocation6], 4
      %s33 = int_to_ptr.vmem [resolvable:$true] %s32
      %38 = dma.hbm_to_vmem [thread:$0]  %s2, 2304, %s33, [#allocation7], 128, 128, 8
    $region13: #{_zoneout_decode_fused.1} parent=1 // pred_fallthru
      _
    // Predicated region
    $region14: #{_zoneout_decode_fused.1} parent=1 // pred_check
      _
    $region15: #{_zoneout_decode_fused.1} parent=1 // pred_check_branch
      %40 = sbr.rel (0) target = $region17
    $region16: #{_zoneout_decode_fused.1} parent=1 // pred_region
      _
    $region17: #{_zoneout_decode_fused.1} parent=1 // pred_fallthru
      _
    // Predicated region
    $region18: #{_zoneout_decode_fused.1} parent=1 // pred_check
      _
    $region19: #{_zoneout_decode_fused.1} parent=1 // pred_check_branch
      %42 = sbr.rel (0) target = $region21
    $region20: #{_zoneout_decode_fused.1} parent=1 // pred_region
      %43 = dma.done [#allocation4], 32
    $region21: #{_zoneout_decode_fused.1} parent=1 // pred_fallthru
      _
    // Predicated region
    $region22: #{_zoneout_decode_fused.1} parent=1 // pred_check
      _
    $region23: #{_zoneout_decode_fused.1} parent=1 // pred_check_branch
      %45 = sbr.rel (0) target = $region25
    $region24: #{_zoneout_decode_fused.1} parent=1 // pred_region
      %46 = dma.done [#allocation7], 2304
    $region25: #{_zoneout_decode_fused.1} parent=1 // pred_fallthru
      _
    %p47 = scmp.eq.s32.totalorder 0, 0
    // Predicated region
    $region26: #{_zoneout_decode_fused.1} parent=1 // pred_check
      %p48 = pneg %p47
    $region27: #{_zoneout_decode_fused.1} parent=1 // pred_check_branch
      %50 = sbr.rel (%p48) target = $region29
    $region28: #{_zoneout_decode_fused.1} parent=1 // pred_region
      %v51 = vld [vmem:[#allocation3] sm:$0x3]
      %52 = vst [vmem:[#allocation2] sm:$0x3] %v51
    $region29: #{_zoneout_decode_fused.1} parent=1 // pred_fallthru
      _
    %v53 = vld [vmem:[#allocation2] sm:$0x3]
    %v54 = vld [vmem:[%s0] sm:$0x3]
    %v55 = vld [vmem:[%s3] sm:$0x3]
    %v56 = vld [vmem:[#allocation6] sm:$0xff]
    %v57 = vld [vmem:[#allocation6 + $0x8] sm:$0xff]
    %v58 = vld [vmem:[#allocation6 + $0x10] sm:$0xff]
    %v59 = vld [vmem:[#allocation6 + $0x18] sm:$0xff]
    %v60 = vld [vmem:[#allocation6 + $0x20] sm:$0xff]
    %v61 = vld [vmem:[#allocation6 + $0x28] sm:$0xff]
    %v62 = vld [vmem:[#allocation6 + $0x30] sm:$0xff]
    %v63 = vld [vmem:[#allocation6 + $0x38] sm:$0xff]
    %v64 = vld [vmem:[#allocation6 + $0x40] sm:$0xff]
    %v65 = vld [vmem:[#allocation6 + $0x48] sm:$0xff]
    %vm66 = vcmask 261120
    %v68 = vsel %vm66, %v53, 0
    %70 = vmatprep.subr.mxu0 0.0
    %71 = vmatpush1.msra.mxu0 %v62
    %72 = vmatprep.subr.mxu0 0.0
    %73 = vmatpush1.msra.mxu0 %v63
    %74 = vmatprep.subr.mxu0 0.0
    %75 = vmatpush1.msra.mxu0 %v64
    %76 = vmatprep.subr.mxu0 0.0
    %77 = vmatpush1.msra.mxu0 %v65
    %78 = vmatprep.subr.mxu0 0.0
    %79 = vmatpush1.msra.mxu0 0.0
    %80 = vmatprep.subr.mxu0 0.0
    %81 = vmatpush1.msra.mxu0 0.0
    %82 = vmatprep.subr.mxu0 0.0
    %83 = vmatpush1.msra.mxu0 0.0
    %84 = vmatprep.subr.mxu0 0.0
    %85 = vmatpush1.msra.mxu0 0.0
    %86 = vmatprep.subr.mxu0 0.0
    %87 = vmatpush1.msra.mxu0 0.0
    %88 = vmatprep.subr.mxu0 0.0
    %89 = vmatpush1.msra.mxu0 0.0
    %90 = vmatprep.subr.mxu0 0.0
    %91 = vmatpush1.msra.mxu0 0.0
    %92 = vmatprep.subr.mxu0 0.0
    %93 = vmatpush1.msra.mxu0 0.0
    %94 = vmatprep.subr.mxu0 0.0
    %95 = vmatpush1.msra.mxu0 0.0
    %96 = vmatprep.subr.mxu0 0.0
    %97 = vmatpush1.msra.mxu0 0.0
    %98 = vmatprep.subr.mxu0 0.0
    %99 = vmatpush1.msra.mxu0 0.0
    %100 = vmatprep.subr.mxu0 0.0
    %101 = vmatpush1.msra.mxu0 0.0
    %102 = vmatprep.subr.mxu0 0.0
    %103 = vmatpush1.msra.mxu0 0.0
    %104 = vmatprep.subr.mxu0 0.0
    %105 = vmatpush1.msra.mxu0 0.0
    %106 = vmatprep.subr.mxu0 0.0
    %107 = vmatpush1.msra.mxu0 0.0
    %108 = vmatprep.subr.mxu0 0.0
    %109 = vmatpush1.msra.mxu0 0.0
    %110 = vmatprep.subr.mxu0 0.0
    %111 = vmatpush1.msra.mxu0 0.0
    %112 = vmatprep.subr.mxu0 0.0
    %113 = vmatpush1.msra.mxu0 0.0
    %114 = vmatprep.subr.mxu0 0.0
    %115 = vmatpush1.msra.mxu0 0.0
    %116 = vmatprep.subr.mxu0 0.0
    %117 = vmatpush1.msra.mxu0 0.0
    %118 = vmatprep.subr.mxu0 0.0
    %119 = vmatpush1.msra.mxu0 0.0
    %120 = vmatprep.subr.mxu0 0.0
    %121 = vmatpush1.msra.mxu0 0.0
    %122 = vmatprep.subr.mxu0 0.0
    %123 = vmatpush1.msra.mxu0 0.0
    %124 = vmatprep.subr.mxu0 0.0
    %125 = vmatpush1.msra.mxu0 0.0
    %126 = vmatprep.subr.mxu0 0.0
    %127 = vmatpush1.msra.mxu0 0.0
    %128 = vmatprep.subr.mxu0 0.0
    %129 = vmatpush1.msra.mxu0 0.0
    %130 = vmatprep.subr.mxu0 0.0
    %131 = vmatpush1.msra.mxu0 0.0
    %132 = vmatprep.subr.mxu0 0.0
    %133 = vmatpush1.msra.mxu0 0.0
    %134 = vmatprep.mubr.f32.mxu0 0.0
    %135 = vmatmul.mubr.f32.gmra.mrb[0].mxu0 %v68
    %v136 = vpop.f32.mrb[0].mxu0
    %v137 = vadd.f32 0.0, %v136
    %v138 = vpop.f32.mrb[0].mxu0
    %139 = vdwg.mxu0
    %vm140 = vcmask 392192
    %v142 = vsel %vm140, %v54, 0
    %144 = vmatprep.subr.mxu0 0.0
    %145 = vmatpush1.msra.mxu0 %v56
    %146 = vmatprep.subr.mxu0 0.0
    %147 = vmatpush1.msra.mxu0 %v57
    %148 = vmatprep.subr.mxu0 0.0
    %149 = vmatpush1.msra.mxu0 %v58
    %150 = vmatprep.subr.mxu0 0.0
    %151 = vmatpush1.msra.mxu0 %v59
    %152 = vmatprep.subr.mxu0 0.0
    %153 = vmatpush1.msra.mxu0 %v60
    %154 = vmatprep.subr.mxu0 0.0
    %155 = vmatpush1.msra.mxu0 %v61
    %156 = vmatprep.subr.mxu0 0.0
    %157 = vmatpush1.msra.mxu0 0.0
    %158 = vmatprep.subr.mxu0 0.0
    %159 = vmatpush1.msra.mxu0 0.0
    %160 = vmatprep.subr.mxu0 0.0
    %161 = vmatpush1.msra.mxu0 0.0
    %162 = vmatprep.subr.mxu0 0.0
    %163 = vmatpush1.msra.mxu0 0.0
    %164 = vmatprep.subr.mxu0 0.0
    %165 = vmatpush1.msra.mxu0 0.0
    %166 = vmatprep.subr.mxu0 0.0
    %167 = vmatpush1.msra.mxu0 0.0
    %168 = vmatprep.subr.mxu0 0.0
    %169 = vmatpush1.msra.mxu0 0.0
    %170 = vmatprep.subr.mxu0 0.0
    %171 = vmatpush1.msra.mxu0 0.0
    %172 = vmatprep.subr.mxu0 0.0
    %173 = vmatpush1.msra.mxu0 0.0
    %174 = vmatprep.subr.mxu0 0.0
    %175 = vmatpush1.msra.mxu0 0.0
    %176 = vmatprep.subr.mxu0 0.0
    %177 = vmatpush1.msra.mxu0 0.0
    %178 = vmatprep.subr.mxu0 0.0
    %179 = vmatpush1.msra.mxu0 0.0
    %180 = vmatprep.subr.mxu0 0.0
    %181 = vmatpush1.msra.mxu0 0.0
    %182 = vmatprep.subr.mxu0 0.0
    %183 = vmatpush1.msra.mxu0 0.0
    %184 = vmatprep.subr.mxu0 0.0
    %185 = vmatpush1.msra.mxu0 0.0
    %186 = vmatprep.subr.mxu0 0.0
    %187 = vmatpush1.msra.mxu0 0.0
    %188 = vmatprep.subr.mxu0 0.0
    %189 = vmatpush1.msra.mxu0 0.0
    %190 = vmatprep.subr.mxu0 0.0
    %191 = vmatpush1.msra.mxu0 0.0
    %192 = vmatprep.subr.mxu0 0.0
    %193 = vmatpush1.msra.mxu0 0.0
    %194 = vmatprep.subr.mxu0 0.0
    %195 = vmatpush1.msra.mxu0 0.0
    %196 = vmatprep.subr.mxu0 0.0
    %197 = vmatpush1.msra.mxu0 0.0
    %198 = vmatprep.subr.mxu0 0.0
    %199 = vmatpush1.msra.mxu0 0.0
    %200 = vmatprep.subr.mxu0 0.0
    %201 = vmatpush1.msra.mxu0 0.0
    %202 = vmatprep.subr.mxu0 0.0
    %203 = vmatpush1.msra.mxu0 0.0
    %204 = vmatprep.subr.mxu0 0.0
    %205 = vmatpush1.msra.mxu0 0.0
    %206 = vmatprep.subr.mxu0 0.0
    %207 = vmatpush1.msra.mxu0 0.0
    %208 = vmatprep.mubr.f32.mxu0 0.0
    %209 = vmatmul.mubr.f32.gmra.mrb[0].mxu0 %v142
    %v210 = vpop.f32.mrb[0].mxu0
    %v211 = vadd.f32 %v137, %v210
    %v212 = vpop.f32.mrb[0].mxu0
    %213 = vdwg.mxu0
    %v214 = vlaneseq
    %v215 = vshrl.u32 %v214, 7
    %v216 = vsub.s32 0, %v215
    %v217 = vrot.slane %v55, %v216
    %v218 = vadd.f32 %v211, %v217
    %v219 = vlaneseq
    %v220 = vand.u32 %v219, 127
    %vm221 = vcmp.ge.s32.totalorder %v220, 64
    %vm222 = vcmp.lt.s32.totalorder %v220, 96
    %vm223 = vmand %vm221, %vm222
    %v224 = vtanh.pop %v218
    %v225 = vxor.u32 %v218, 2147483648
    %v226 = vmul.f32 %v225, 1.442695
    %v227 = vpow.pop %v226
    %v228 = vadd.f32 %v227, 1.0
    %v229 = vrcp.pop %v228
    %v230 = vmul.f32 1.0, %v229
    %v231 = vsel %vm223, %v224, %v230
    %v232 = vmul.f32 %v231, %v53
    %234 = vrot.lane.b32.xlu0 %v231, 64
    %v235 = vpop.permute.xlu0 %234
    %v237 = vmul.f32 %v231, %v235
    %239 = vrot.lane.b32.xlu0 %v237, 32
    %v240 = vpop.permute.xlu0 %239
    %v242 = vadd.f32 %v232, %v240
    %v243 = vtanh.pop %v242
    %245 = vrot.lane.b32.xlu0 %v243, 64
    %v246 = vpop.permute.xlu0 %245
    %v248 = vmul.f32 %v231, %v246
    %v249 = vsub.f32 %v242, %v53
    %v250 = vmul.f32 %v249, 0.9
    %v251 = vadd.f32 %v53, %v250
    %252 = vrot.lane.b32.xlu0 %v53, 96
    %v253 = vpop.permute.xlu0 %252
    %v255 = vsub.f32 %v248, %v253
    %v256 = vmul.f32 %v255, 0.9
    %258 = vrot.lane.b32.xlu0 %v256, 32
    %v259 = vpop.permute.xlu0 %258
    %v261 = vadd.f32 %v53, %v259
    %v262 = vld [vmem:[#allocation6 + $0x50] sm:$0xff]
    %v263 = vld [vmem:[#allocation6 + $0x58] sm:$0xff]
    %v264 = vld [vmem:[#allocation6 + $0x60] sm:$0xff]
    %v265 = vld [vmem:[#allocation6 + $0x68] sm:$0xff]
    %v266 = vld [vmem:[#allocation6 + $0x70] sm:$0xff]
    %v267 = vld [vmem:[#allocation6 + $0x78] sm:$0xff]
    %v268 = vld [vmem:[#allocation6 + $0x80] sm:$0xff]
    %v269 = vld [vmem:[#allocation6 + $0x88] sm:$0xff]
    %270 = vrot.lane.b32.xlu0 %v53, 64
    %v271 = vpop.permute.xlu0 %270
    %v272 = vsel %vm66, %v271, 0
    %274 = vmatprep.subr.mxu0 0.0
    %275 = vmatpush1.msra.mxu0 %v266
    %276 = vmatprep.subr.mxu0 0.0
    %277 = vmatpush1.msra.mxu0 %v267
    %278 = vmatprep.subr.mxu0 0.0
    %279 = vmatpush1.msra.mxu0 %v268
    %280 = vmatprep.subr.mxu0 0.0
    %281 = vmatpush1.msra.mxu0 %v269
    %282 = vmatprep.subr.mxu0 0.0
    %283 = vmatpush1.msra.mxu0 0.0
    %284 = vmatprep.subr.mxu0 0.0
    %285 = vmatpush1.msra.mxu0 0.0
    %286 = vmatprep.subr.mxu0 0.0
    %287 = vmatpush1.msra.mxu0 0.0
    %288 = vmatprep.subr.mxu0 0.0
    %289 = vmatpush1.msra.mxu0 0.0
    %290 = vmatprep.subr.mxu0 0.0
    %291 = vmatpush1.msra.mxu0 0.0
    %292 = vmatprep.subr.mxu0 0.0
    %293 = vmatpush1.msra.mxu0 0.0
    %294 = vmatprep.subr.mxu0 0.0
    %295 = vmatpush1.msra.mxu0 0.0
    %296 = vmatprep.subr.mxu0 0.0
    %297 = vmatpush1.msra.mxu0 0.0
    %298 = vmatprep.subr.mxu0 0.0
    %299 = vmatpush1.msra.mxu0 0.0
    %300 = vmatprep.subr.mxu0 0.0
    %301 = vmatpush1.msra.mxu0 0.0
    %302 = vmatprep.subr.mxu0 0.0
    %303 = vmatpush1.msra.mxu0 0.0
    %304 = vmatprep.subr.mxu0 0.0
    %305 = vmatpush1.msra.mxu0 0.0
    %306 = vmatprep.subr.mxu0 0.0
    %307 = vmatpush1.msra.mxu0 0.0
    %308 = vmatprep.subr.mxu0 0.0
    %309 = vmatpush1.msra.mxu0 0.0
    %310 = vmatprep.subr.mxu0 0.0
    %311 = vmatpush1.msra.mxu0 0.0
    %312 = vmatprep.subr.mxu0 0.0
    %313 = vmatpush1.msra.mxu0 0.0
    %314 = vmatprep.subr.mxu0 0.0
    %315 = vmatpush1.msra.mxu0 0.0
    %316 = vmatprep.subr.mxu0 0.0
    %317 = vmatpush1.msra.mxu0 0.0
    %318 = vmatprep.subr.mxu0 0.0
    %319 = vmatpush1.msra.mxu0 0.0
    %320 = vmatprep.subr.mxu0 0.0
    %321 = vmatpush1.msra.mxu0 0.0
    %322 = vmatprep.subr.mxu0 0.0
    %323 = vmatpush1.msra.mxu0 0.0
    %324 = vmatprep.subr.mxu0 0.0
    %325 = vmatpush1.msra.mxu0 0.0
    %326 = vmatprep.subr.mxu0 0.0
    %327 = vmatpush1.msra.mxu0 0.0
    %328 = vmatprep.subr.mxu0 0.0
    %329 = vmatpush1.msra.mxu0 0.0
    %330 = vmatprep.subr.mxu0 0.0
    %331 = vmatpush1.msra.mxu0 0.0
    %332 = vmatprep.subr.mxu0 0.0
    %333 = vmatpush1.msra.mxu0 0.0
    %334 = vmatprep.subr.mxu0 0.0
    %335 = vmatpush1.msra.mxu0 0.0
    %336 = vmatprep.subr.mxu0 0.0
    %337 = vmatpush1.msra.mxu0 0.0
    %338 = vmatprep.mubr.f32.mxu0 0.0
    %339 = vmatmul.mubr.f32.gmra.mrb[0].mxu0 %v272
    %v340 = vpop.f32.mrb[0].mxu0
    %v341 = vadd.f32 0.0, %v340
    %v342 = vpop.f32.mrb[0].mxu0
    %343 = vdwg.mxu0
    %v345 = vsel %vm66, %v261, 0
    %347 = vmatprep.subr.mxu0 0.0
    %348 = vmatpush1.msra.mxu0 %v262
    %349 = vmatprep.subr.mxu0 0.0
    %350 = vmatpush1.msra.mxu0 %v263
    %351 = vmatprep.subr.mxu0 0.0
    %352 = vmatpush1.msra.mxu0 %v264
    %353 = vmatprep.subr.mxu0 0.0
    %354 = vmatpush1.msra.mxu0 %v265
    %355 = vmatprep.subr.mxu0 0.0
    %356 = vmatpush1.msra.mxu0 0.0
    %357 = vmatprep.subr.mxu0 0.0
    %358 = vmatpush1.msra.mxu0 0.0
    %359 = vmatprep.subr.mxu0 0.0
    %360 = vmatpush1.msra.mxu0 0.0
    %361 = vmatprep.subr.mxu0 0.0
    %362 = vmatpush1.msra.mxu0 0.0
    %363 = vmatprep.subr.mxu0 0.0
    %364 = vmatpush1.msra.mxu0 0.0
    %365 = vmatprep.subr.mxu0 0.0
    %366 = vmatpush1.msra.mxu0 0.0
    %367 = vmatprep.subr.mxu0 0.0
    %368 = vmatpush1.msra.mxu0 0.0
    %369 = vmatprep.subr.mxu0 0.0
    %370 = vmatpush1.msra.mxu0 0.0
    %371 = vmatprep.subr.mxu0 0.0
    %372 = vmatpush1.msra.mxu0 0.0
    %373 = vmatprep.subr.mxu0 0.0
    %374 = vmatpush1.msra.mxu0 0.0
    %375 = vmatprep.subr.mxu0 0.0
    %376 = vmatpush1.msra.mxu0 0.0
    %377 = vmatprep.subr.mxu0 0.0
    %378 = vmatpush1.msra.mxu0 0.0
    %379 = vmatprep.subr.mxu0 0.0
    %380 = vmatpush1.msra.mxu0 0.0
    %381 = vmatprep.subr.mxu0 0.0
    %382 = vmatpush1.msra.mxu0 0.0
    %383 = vmatprep.subr.mxu0 0.0
    %384 = vmatpush1.msra.mxu0 0.0
    %385 = vmatprep.subr.mxu0 0.0
    %386 = vmatpush1.msra.mxu0 0.0
    %387 = vmatprep.subr.mxu0 0.0
    %388 = vmatpush1.msra.mxu0 0.0
    %389 = vmatprep.subr.mxu0 0.0
    %390 = vmatpush1.msra.mxu0 0.0
    %391 = vmatprep.subr.mxu0 0.0
    %392 = vmatpush1.msra.mxu0 0.0
    %393 = vmatprep.subr.mxu0 0.0
    %394 = vmatpush1.msra.mxu0 0.0
    %395 = vmatprep.subr.mxu0 0.0
    %396 = vmatpush1.msra.mxu0 0.0
    %397 = vmatprep.subr.mxu0 0.0
    %398 = vmatpush1.msra.mxu0 0.0
    %399 = vmatprep.subr.mxu0 0.0
    %400 = vmatpush1.msra.mxu0 0.0
    %401 = vmatprep.subr.mxu0 0.0
    %402 = vmatpush1.msra.mxu0 0.0
    %403 = vmatprep.subr.mxu0 0.0
    %404 = vmatpush1.msra.mxu0 0.0
    %405 = vmatprep.subr.mxu0 0.0
    %406 = vmatpush1.msra.mxu0 0.0
    %407 = vmatprep.subr.mxu0 0.0
    %408 = vmatpush1.msra.mxu0 0.0
    %409 = vmatprep.subr.mxu0 0.0
    %410 = vmatpush1.msra.mxu0 0.0
    %411 = vmatprep.mubr.f32.mxu0 0.0
    %412 = vmatmul.mubr.f32.gmra.mrb[0].mxu0 %v345
    %v413 = vpop.f32.mrb[0].mxu0
    %v414 = vadd.f32 %v341, %v413
    %v415 = vpop.f32.mrb[0].mxu0
    %416 = vdwg.mxu0
    %v417 = vlaneseq
    %v418 = vshrl.u32 %v417, 7
    %v419 = vsub.s32 1, %v418
    %v420 = vrot.slane %v55, %v419
    %v421 = vadd.f32 %v414, %v420
    %v422 = vtanh.pop %v421
    %v423 = vxor.u32 %v421, 2147483648
    %v424 = vmul.f32 %v423, 1.442695
    %v425 = vpow.pop %v424
    %v426 = vadd.f32 %v425, 1.0
    %v427 = vrcp.pop %v426
    %v428 = vmul.f32 1.0, %v427
    %v429 = vsel %vm223, %v422, %v428
    %v431 = vmul.f32 %v429, %v271
    %433 = vrot.lane.b32.xlu0 %v429, 64
    %v434 = vpop.permute.xlu0 %433
    %v436 = vmul.f32 %v429, %v434
    %438 = vrot.lane.b32.xlu0 %v436, 32
    %v439 = vpop.permute.xlu0 %438
    %v441 = vadd.f32 %v431, %v439
    %v442 = vtanh.pop %v441
    %444 = vrot.lane.b32.xlu0 %v442, 64
    %v445 = vpop.permute.xlu0 %444
    %v447 = vmul.f32 %v429, %v445
    %v448 = vsub.f32 %v441, %v271
    %v449 = vmul.f32 %v448, 0.9
    %451 = vrot.lane.b32.xlu0 %v449, 64
    %v452 = vpop.permute.xlu0 %451
    %v454 = vadd.f32 %v53, %v452
    %455 = vrot.lane.b32.xlu0 %v53, 32
    %v456 = vpop.permute.xlu0 %455
    %v458 = vsub.f32 %v447, %v456
    %v459 = vmul.f32 %v458, 0.9
    %461 = vrot.lane.b32.xlu0 %v459, 96
    %v462 = vpop.permute.xlu0 %461
    %v464 = vadd.f32 %v53, %v462
    %v465 = vsel %vm66, %v261, %v251
    %vm466 = vcmask 523264
    %v467 = vsel %vm466, %v465, %v464
    %vm468 = vcmask 785408
    %v469 = vsel %vm468, %v467, %v454
    %470 = vst [vmem:[#allocation2] sm:$0x3] %v469
    %472 = vrot.lane.b32.xlu0 %v464, 64
    %v473 = vpop.permute.xlu0 %472
    %vm475 = vcmask 254976
    %476 = vst.msk [vmem:[#allocation8] sm:$0x3] %vm475, %v473
    %477 = vst [vmem:[#allocation9] sm:$0x3] %v469
    // Predicated region
    $region30: #{_zoneout_decode_fused.1} parent=1 // pred_check
      _
    $region31: #{_zoneout_decode_fused.1} parent=1 // pred_check_branch
      %479 = sbr.rel (0) target = $region33
    $region32: #{_zoneout_decode_fused.1} parent=1 // pred_region
      %s481 = ssub.s32 32, 32
      %482 = vsyncadd [#allocation5], %s481
      %s484 = sshll.u32 [#allocation8], 4
      %s485 = int_to_ptr.vmem [resolvable:$true] %s484
      %487 = dma.vmem_to_hbm [thread:$0]  %s485, 32, %s4, [#allocation5]
    $region33: #{_zoneout_decode_fused.1} parent=1 // pred_fallthru
      _
    // Predicated region
    $region34: #{_zoneout_decode_fused.1} parent=1 // pred_check
      _
    $region35: #{_zoneout_decode_fused.1} parent=1 // pred_check_branch
      %489 = sbr.rel (0) target = $region37
    $region36: #{_zoneout_decode_fused.1} parent=1 // pred_region
      %s491 = ssub.s32 32, 32
      %492 = vsyncadd [#allocation10], %s491
      %s494 = sshll.u32 [#allocation9], 4
      %s495 = int_to_ptr.vmem [resolvable:$true] %s494
      %497 = dma.vmem_to_hbm [thread:$0]  %s495, 32, %s5, [#allocation10]
    $region37: #{_zoneout_decode_fused.1} parent=1 // pred_fallthru
      _
    // Predicated region
    $region38: #{_zoneout_decode_fused.1} parent=1 // pred_check
      _
    $region39: #{_zoneout_decode_fused.1} parent=1 // pred_check_branch
      %499 = sbr.rel (0) target = $region41
    $region40: #{_zoneout_decode_fused.1} parent=1 // pred_region
      %500 = dma.done [#allocation5], 32
    $region41: #{_zoneout_decode_fused.1} parent=1 // pred_fallthru
      _
    // Predicated region
    $region42: #{_zoneout_decode_fused.1} parent=1 // pred_check
      _
    $region43: #{_zoneout_decode_fused.1} parent=1 // pred_check_branch
      %502 = sbr.rel (0) target = $region45
    $region44: #{_zoneout_decode_fused.1} parent=1 // pred_region
      %503 = dma.done [#allocation10], 32
    $region45: #{_zoneout_decode_fused.1} parent=1 // pred_fallthru
      _
    %504 = vsyncpa [#allocation4], 1
    %505 = vsyncpa [#allocation7], 1
    %506 = vsyncpa [#allocation5], 1
    %507 = vsyncpa [#allocation10], 1

</llo_original>
